<compile_context>
chip_gen: v5e
topology: v5e:2x2
jax: 0.10.0
libtpu: 0.0.40
codegen_flags: <defaults>
</compile_context>

<pallas_src>
import jax
import jax.numpy as jnp
from jax.experimental import pallas as pl
from jax.experimental.pallas import tpu as pltpu


def mlp_kernel(x_ref, w1_ref, b1_ref, w2_ref, b2_ref, o_ref):
    # In-kernel f32 -> bf16 cast of the x tile (VPU work, hidden under the MXU).
    x = x_ref[...].astype(w1_ref.dtype)
    # fc1: x @ W1 + b1, ReLU.  bf16 operands, f32 accumulation on the MXU.
    h = jnp.dot(x, w1_ref[...], preferred_element_type=jnp.float32)
    h = jnp.maximum(h + b1_ref[...], 0.0)
    # Dropout(0.3): eval-mode identity (see TODO at top of file).
    # fc2: h @ W2 + b2 (unpadded C columns; output block last dim == full dim).
    h = h.astype(w2_ref.dtype)
    out = jnp.dot(h, w2_ref[...], preferred_element_type=jnp.float32)
    o_ref[...] = (out + b2_ref[...]).astype(o_ref.dtype)


def _choose_block_b(B, D, C, vmem_budget=24 << 20):
    """Pick the batch tile TB.

    - B < 512: single block (per-step overhead would dominate).
    - Otherwise: largest multiple of 128 that (a) fits the VMEM budget with
      double-buffered x / out tiles plus resident weights, (b) is <= 2048,
      (c) leaves >= 2 grid steps (v7x megacore), and (d) if possible divides B
      exactly (no batch-pad pass over x).
    """
    if B < 512:
        return B
    weights_bytes = D * 128 * 2 + 128 * C * 2 + (128 + C) * 4
    # double-buffered x (f32) + double-buffered out (f32, lanes pad to >=128)
    per_row = 2 * D * 4 + 2 * max(C, 128) * 4
    tb_cap = max(128, (vmem_budget - weights_bytes) // per_row)
    tb_cap = (tb_cap // 128) * 128
    half = max(128, (B // 2 // 128) * 128)      # guarantee >= 2 grid steps
    tb_max = min(2048, tb_cap, half)
    for tb in range(tb_max, 127, -128):         # prefer a divisor of B (no pad)
        if B % tb == 0:
            return tb
    return tb_max                               # fallback: pad the batch


def prepare_params(w1, b1, w2, b2, compute_dtype=jnp.bfloat16):
    """One-time weight prep (bf16 cast + bias reshape), hoisted out of the
    per-call forward path.  Weights are stored [in, out] for x @ W."""
    return (w1.astype(compute_dtype),
            b1.astype(jnp.float32).reshape(1, -1),
            w2.astype(compute_dtype),
            b2.astype(jnp.float32).reshape(1, -1))


def simple_cnn_forward(x, w1c, b1, w2c, b2):
    """x: [B, D] f32; w1c: [D, 128] bf16; b1: [1, 128] f32;
    w2c: [128, C] bf16; b2: [1, C] f32.  Returns [B, C] f32 logits."""
    B, D = x.shape
    H = w1c.shape[1]
    C = w2c.shape[1]

    TB = _choose_block_b(B, D, C)
    B_pad = pl.cdiv(B, TB) * TB
    xp = jnp.pad(x, ((0, B_pad - B), (0, 0))) if B_pad != B else x
    num_blocks = B_pad // TB

    cost = pl.CostEstimate(
        flops=2 * B_pad * (D * H + H * C),
        transcendentals=0,
        bytes_accessed=(B_pad * D * 4                    # x (f32)
                        + D * H * 2 + H * C * 2          # weights (bf16)
                        + (H + C) * 4                    # biases (f32)
                        + B_pad * C * 4),                # output (f32, unpadded)
    )

    out = pl.pallas_call(
        mlp_kernel,
        out_shape=jax.ShapeDtypeStruct((B_pad, C), jnp.float32),
        grid_spec=pltpu.PrefetchScalarGridSpec(
            num_scalar_prefetch=0,
            grid=(num_blocks,),
            in_specs=[
                pl.BlockSpec((TB, D), lambda i: (i, 0)),   # x tile (f32)
                pl.BlockSpec((D, H), lambda i: (0, 0)),    # W1 (VMEM-resident)
                pl.BlockSpec((1, H), lambda i: (0, 0)),    # b1 (resident)
                pl.BlockSpec((H, C), lambda i: (0, 0)),    # W2 (resident)
                pl.BlockSpec((1, C), lambda i: (0, 0)),    # b2 (resident)
            ],
            out_specs=pl.BlockSpec((TB, C), lambda i: (i, 0)),
        ),
        compiler_params=pltpu.CompilerParams(
            dimension_semantics=("parallel",),   # megacore-shardable on v7x
            vmem_limit_bytes=32 * 1024 * 1024,   # fits v7x/v6e/v5e scoped VMEM
        ),
        cost_estimate=cost,
    )(xp, w1c, b1, w2c, b2)

    return out[:B] if B_pad != B else out


def init_params(key, input_dim, num_classes, hidden=128):
    """Deterministic init mimicking PyTorch nn.Linear defaults:
    U(-1/sqrt(fan_in), 1/sqrt(fan_in)) for weights and biases."""
    k1, k2, k3, k4 = jax.random.split(key, 4)
    bound1 = 1.0 / jnp.sqrt(input_dim)
    bound2 = 1.0 / jnp.sqrt(hidden)
    # stored as [in, out] (transpose of PyTorch's [out, in]) for x @ W
    w1 = jax.random.uniform(k1, (input_dim, hidden), jnp.float32, -bound1, bound1)
    b1 = jax.random.uniform(k2, (1, hidden), jnp.float32, -bound1, bound1)
    w2 = jax.random.uniform(k3, (hidden, num_classes), jnp.float32, -bound2, bound2)
    b2 = jax.random.uniform(k4, (1, num_classes), jnp.float32, -bound2, bound2)
    return w1, b1, w2, b2


if __name__ == "__main__":
    key = jax.random.PRNGKey(0)
    batch, input_dim, num_classes = 8, 32, 10

    kx, kp = jax.random.split(key)
    x = jax.random.normal(kx, (batch, input_dim), jnp.float32)
    w1, b1, w2, b2 = init_params(kp, input_dim, num_classes)
    w1c, b1p, w2c, b2p = prepare_params(w1, b1, w2, b2)   # one-time weight prep

    out = simple_cnn_forward(x, w1c, b1p, w2c, b2p)
    out = jax.block_until_ready(out)
    assert out.shape == (batch, num_classes)
    assert out.dtype == jnp.float32

    # Reference with matching bf16 operand rounding (MXU accumulates in f32).
    xb = x.astype(jnp.bfloat16).astype(jnp.float32)
    w1b = w1.astype(jnp.bfloat16).astype(jnp.float32)
    w2b = w2.astype(jnp.bfloat16).astype(jnp.float32)
    h = jnp.maximum(xb @ w1b + b1, 0.0)
    hb = h.astype(jnp.bfloat16).astype(jnp.float32)
    ref_bf16 = hb @ w2b + b2
    assert jnp.allclose(out, ref_bf16, atol=2e-2, rtol=2e-2)

    # Loose sanity check against the full-f32 reference (bf16 rounding only).
    ref_f32 = jnp.maximum(x @ w1 + b1, 0.0) @ w2 + b2
    assert jnp.allclose(out, ref_f32, atol=1e-1, rtol=1e-1)

    print("KERNEL_OK")
</pallas_src>

<mosaic_0001>
module attributes {stable_mosaic.version = 11 : i64} {
  func.func @mlp_kernel(%arg0: i32, %arg1: memref<8x32xf32, #tpu.memory_space<vmem>>, %arg2: memref<32x128xbf16, #tpu.memory_space<vmem>>, %arg3: memref<1x128xf32, #tpu.memory_space<vmem>>, %arg4: memref<128x10xbf16, #tpu.memory_space<vmem>>, %arg5: memref<1x10xf32, #tpu.memory_space<vmem>>, %arg6: memref<8x10xf32, #tpu.memory_space<vmem>>) attributes {dimension_semantics = [#tpu.dimension_semantics<parallel>], iteration_bounds = array<i64: 1>, scalar_prefetch = 0 : i64, scratch_operands = 0 : i64, tpu.core_type = #tpu.core_type<tc>, window_params = [{transform_indices = @transform_0, window_bounds = array<i64: 8, 32>}, {pipeline_mode = #tpu.pipeline_mode<synchronous>, transform_indices = @transform_1, window_bounds = array<i64: 32, 128>}, {pipeline_mode = #tpu.pipeline_mode<synchronous>, transform_indices = @transform_2, window_bounds = array<i64: 1, 128>}, {pipeline_mode = #tpu.pipeline_mode<synchronous>, transform_indices = @transform_3, window_bounds = array<i64: 128, 10>}, {pipeline_mode = #tpu.pipeline_mode<synchronous>, transform_indices = @transform_4, window_bounds = array<i64: 1, 10>}, {transform_indices = @transform_5, window_bounds = array<i64: 8, 10>}]} {
    %c0 = arith.constant 0 : index
    %c0_0 = arith.constant 0 : index
    %0 = vector.load %arg1[%c0, %c0_0] : memref<8x32xf32, #tpu.memory_space<vmem>>, vector<8x32xf32>
    %1 = arith.truncf %0 : vector<8x32xf32> to vector<8x32xbf16>
    %c0_1 = arith.constant 0 : index
    %c0_2 = arith.constant 0 : index
    %2 = vector.load %arg2[%c0_1, %c0_2] : memref<32x128xbf16, #tpu.memory_space<vmem>>, vector<32x128xbf16>
    %cst = arith.constant dense<0.000000e+00> : vector<8x128xf32>
    %3 = tpu.matmul %1, %2, %cst {dimension_numbers = #tpu.dot_dimension_numbers<[1], [0], [0], [1], [0, 0, 1, 1], [], []>} : vector<8x32xbf16>, vector<32x128xbf16>, vector<8x128xf32> -> vector<8x128xf32>
    %c0_3 = arith.constant 0 : index
    %c0_4 = arith.constant 0 : index
    %4 = vector.load %arg3[%c0_3, %c0_4] : memref<1x128xf32, #tpu.memory_space<vmem>>, vector<1x128xf32>
    %5 = vector.broadcast %4 : vector<1x128xf32> to vector<8x128xf32>
    %6 = arith.addf %3, %5 : vector<8x128xf32>
    %cst_5 = arith.constant 0.000000e+00 : f32
    %7 = vector.broadcast %cst_5 : f32 to vector<8x128xf32>
    %8 = arith.maximumf %6, %7 : vector<8x128xf32>
    %9 = arith.truncf %8 : vector<8x128xf32> to vector<8x128xbf16>
    %c0_6 = arith.constant 0 : index
    %c0_7 = arith.constant 0 : index
    %10 = vector.load %arg4[%c0_6, %c0_7] : memref<128x10xbf16, #tpu.memory_space<vmem>>, vector<128x10xbf16>
    %cst_8 = arith.constant dense<0.000000e+00> : vector<8x10xf32>
    %11 = tpu.matmul %9, %10, %cst_8 {dimension_numbers = #tpu.dot_dimension_numbers<[1], [0], [0], [1], [0, 0, 1, 1], [], []>} : vector<8x128xbf16>, vector<128x10xbf16>, vector<8x10xf32> -> vector<8x10xf32>
    %c0_9 = arith.constant 0 : index
    %c0_10 = arith.constant 0 : index
    %12 = vector.load %arg5[%c0_9, %c0_10] : memref<1x10xf32, #tpu.memory_space<vmem>>, vector<1x10xf32>
    %13 = vector.broadcast %12 : vector<1x10xf32> to vector<8x10xf32>
    %14 = arith.addf %11, %13 : vector<8x10xf32>
    %c0_11 = arith.constant 0 : index
    %c0_12 = arith.constant 0 : index
    %15 = vector.load %arg6[%c0_11, %c0_12] : memref<8x10xf32, #tpu.memory_space<vmem>>, vector<8x10xf32>
    tpu.vector_store %arg6[%c0_11, %c0_12], %14 {strides = array<i32>} : memref<8x10xf32, #tpu.memory_space<vmem>>, vector<8x10xf32>,
    return
  }
  func.func @transform_0(%arg0: i32) -> (i32, i32) {
    %c0_i32 = arith.constant 0 : i32
    %c0_i32_0 = arith.constant 0 : i32
    return %arg0, %c0_i32 : i32, i32
  }
  func.func @transform_1(%arg0: i32) -> (i32, i32) {
    %c0_i32 = arith.constant 0 : i32
    %c0_i32_0 = arith.constant 0 : i32
    %c0_i32_1 = arith.constant 0 : i32
    return %c0_i32, %c0_i32_0 : i32, i32
  }
  func.func @transform_2(%arg0: i32) -> (i32, i32) {
    %c0_i32 = arith.constant 0 : i32
    %c0_i32_0 = arith.constant 0 : i32
    %c0_i32_1 = arith.constant 0 : i32
    return %c0_i32, %c0_i32_0 : i32, i32
  }
  func.func @transform_3(%arg0: i32) -> (i32, i32) {
    %c0_i32 = arith.constant 0 : i32
    %c0_i32_0 = arith.constant 0 : i32
    %c0_i32_1 = arith.constant 0 : i32
    return %c0_i32, %c0_i32_0 : i32, i32
  }
  func.func @transform_4(%arg0: i32) -> (i32, i32) {
    %c0_i32 = arith.constant 0 : i32
    %c0_i32_0 = arith.constant 0 : i32
    %c0_i32_1 = arith.constant 0 : i32
    return %c0_i32, %c0_i32_0 : i32, i32
  }
  func.func @transform_5(%arg0: i32) -> (i32, i32) {
    %c0_i32 = arith.constant 0 : i32
    %c0_i32_0 = arith.constant 0 : i32
    return %arg0, %c0_i32 : i32, i32
  }
}

</mosaic_0001>

<llo_original>
// kernel: tpu_custom_call.1
$region0: #{tpu_custom_call.1}
  #allocation0 [shape = 'u32[]', space=smem, size = 0x4, offset = 0x4, fixed_abs, tag = 'smem constant byte address 0x4 - core index']
  #allocation1 [shape = 'u32[72,128]{1,0:T(1,128)}', space=vmem, size = 0x9000, scoped, tag = 'internal scratch']
  %s0 = inlined_call_operand.vmem [shape: f32[8,32], index: 0, kind: input, shape index: {}]
  %s1 = inlined_call_operand.vmem [shape: bf16[32,128], index: 1, kind: input, shape index: {}]
  %s2 = inlined_call_operand.vmem [shape: f32[1,128], index: 2, kind: input, shape index: {}]
  %s3 = inlined_call_operand.vmem [shape: bf16[128,10], index: 3, kind: input, shape index: {}]
  %s4 = inlined_call_operand.vmem [shape: f32[1,10], index: 4, kind: input, shape index: {}]
  %s5 = inlined_call_operand.hbm [shape: f32[8,10], index: 5, kind: output, shape index: {}]
  %s6 = sld [smem:[#allocation0]]
  $region30: #{tpu_custom_call.1} parent=0
    _
  %s8 = ssub.s32 1, %s6
  %s9 = scalar_select 0, %s8, %s6
  $region1: #{tpu_custom_call.1} parent=0
    #allocation2 [shape = 'u8[4096]{0}', space=vmem, size = 0x1000, scoped, tag = 'output window, operand 0, single buffered']
    #allocation3 [shape = 's32[1]{0}', space=sflag, size = 0x4, scoped, tag = 'scoped memory for tpu_custom_call.1']
    %10 = vsyncpa [#allocation3], 0
    // Predicated region
    $region2: #{tpu_custom_call.1} parent=1 // pred_check
      _
    $region3: #{tpu_custom_call.1} parent=1 // pred_check_branch
      %12 = sbr.rel (0) target = $region5
    $region4: #{tpu_custom_call.1} parent=1 // pred_region
      _
    $region5: #{tpu_custom_call.1} parent=1 // pred_fallthru
      _
    // Predicated region
    $region6: #{tpu_custom_call.1} parent=1 // pred_check
      _
    $region7: #{tpu_custom_call.1} parent=1 // pred_check_branch
      %14 = sbr.rel (0) target = $region9
    $region8: #{tpu_custom_call.1} parent=1 // pred_region
      _
    $region9: #{tpu_custom_call.1} parent=1 // pred_fallthru
      _
    // Predicated region
    $region10: #{tpu_custom_call.1} parent=1 // pred_check
      _
    $region11: #{tpu_custom_call.1} parent=1 // pred_check_branch
      %16 = sbr.rel (0) target = $region13
    $region12: #{tpu_custom_call.1} parent=1 // pred_region
      _
    $region13: #{tpu_custom_call.1} parent=1 // pred_fallthru
      _
    // Predicated region
    $region14: #{tpu_custom_call.1} parent=1 // pred_check
      _
    $region15: #{tpu_custom_call.1} parent=1 // pred_check_branch
      %18 = sbr.rel (0) target = $region17
    $region16: #{tpu_custom_call.1} parent=1 // pred_region
      _
    $region17: #{tpu_custom_call.1} parent=1 // pred_fallthru
      _
    // Predicated region
    $region18: #{tpu_custom_call.1} parent=1 // pred_check
      _
    $region19: #{tpu_custom_call.1} parent=1 // pred_check_branch
      %20 = sbr.rel (0) target = $region21
    $region20: #{tpu_custom_call.1} parent=1 // pred_region
      _
    $region21: #{tpu_custom_call.1} parent=1 // pred_fallthru
      _
    %v22 = vld [vmem:[%s0] sm:$0xff]
    %v23 = vpack.c.bf16 %v22, %v22
    %v24 = vld [vmem:[%s1] sm:$0xf]
    %v25 = vld [vmem:[%s1 + $0x4] sm:$0xf]
    %v26 = vld [vmem:[%s1 + $0x8] sm:$0xf]
    %v27 = vld [vmem:[%s1 + $0xc] sm:$0xf]
    %v28 = vld [vmem:[%s2] sm:$0x1]
    %v30 = vperm.slane %v28, 0
    %v36 = vunpack.c.l.b16 %v24
    %v37 = vunpack.c.l.b16 %v25
    %v38 = vunpack.c.l.b16 %v26
    %v39 = vunpack.c.l.b16 %v27
    %v40 = vpack.c.b16 %v37, %v36
    %v41 = vpack.c.b16 %v39, %v38
    %vm44 = vcmask 261120
    %v46 = vsel %vm44, %v23, 0
    %48 = vmatpush.bf16.msra.mxu0 0
    %49 = vmatpush.bf16.msra.mxu0 0
    %50 = vmatpush.bf16.msra.mxu0 0
    %51 = vmatpush.bf16.msra.mxu0 0
    %52 = vmatpush.bf16.msra.mxu0 0
    %53 = vmatpush.bf16.msra.mxu0 0
    %54 = vmatpush.bf16.msra.mxu0 %v41
    %55 = vmatpush.bf16.msra.mxu0 %v40
    %56 = vmatmul.bf16.gmra.mxu0 %v46
    %v57 = vpop.f32.mrf.mxu0
    %v58 = vadd.f32 %v30, %v57
    %v59 = vpop.f32.mrf.mxu0
    %60 = vdwg.mxu0
    %v61 = vmax.f32 %v58, 0.0
    %v62 = vpack.c.bf16 %v61, %v61
    %v63 = vld [vmem:[%s3] sm:$0xf]
    %v64 = vld [vmem:[%s3 + $0x4] sm:$0xf]
    %v65 = vld [vmem:[%s3 + $0x8] sm:$0xf]
    %v66 = vld [vmem:[%s3 + $0xc] sm:$0xf]
    %v67 = vld [vmem:[%s3 + $0x10] sm:$0xf]
    %v68 = vld [vmem:[%s3 + $0x14] sm:$0xf]
    %v69 = vld [vmem:[%s3 + $0x18] sm:$0xf]
    %v70 = vld [vmem:[%s3 + $0x1c] sm:$0xf]
    %v71 = vld [vmem:[%s3 + $0x20] sm:$0xf]
    %v72 = vld [vmem:[%s3 + $0x24] sm:$0xf]
    %v73 = vld [vmem:[%s3 + $0x28] sm:$0xf]
    %v74 = vld [vmem:[%s3 + $0x2c] sm:$0xf]
    %v75 = vld [vmem:[%s3 + $0x30] sm:$0xf]
    %v76 = vld [vmem:[%s3 + $0x34] sm:$0xf]
    %v77 = vld [vmem:[%s3 + $0x38] sm:$0xf]
    %v78 = vld [vmem:[%s3 + $0x3c] sm:$0xf]
    %v79 = vld [vmem:[%s4] sm:$0x1]
    %v81 = vperm.slane %v79, 0
    %v99 = vunpack.c.l.b16 %v63
    %v100 = vunpack.c.l.b16 %v64
    %v101 = vunpack.c.l.b16 %v65
    %v102 = vunpack.c.l.b16 %v66
    %v103 = vunpack.c.l.b16 %v67
    %v104 = vunpack.c.l.b16 %v68
    %v105 = vunpack.c.l.b16 %v69
    %v106 = vunpack.c.l.b16 %v70
    %v107 = vunpack.c.l.b16 %v71
    %v108 = vunpack.c.l.b16 %v72
    %v109 = vunpack.c.l.b16 %v73
    %v110 = vunpack.c.l.b16 %v74
    %v111 = vunpack.c.l.b16 %v75
    %v112 = vunpack.c.l.b16 %v76
    %v113 = vunpack.c.l.b16 %v77
    %v114 = vunpack.c.l.b16 %v78
    %v115 = vpack.c.b16 %v100, %v99
    %v116 = vpack.c.b16 %v102, %v101
    %v117 = vpack.c.b16 %v104, %v103
    %v118 = vpack.c.b16 %v106, %v105
    %v119 = vpack.c.b16 %v108, %v107
    %v120 = vpack.c.b16 %v110, %v109
    %v121 = vpack.c.b16 %v112, %v111
    %v122 = vpack.c.b16 %v114, %v113
    %131 = vmatpush.bf16.msra.mxu0 %v122
    %132 = vmatpush.bf16.msra.mxu0 %v121
    %133 = vmatpush.bf16.msra.mxu0 %v120
    %134 = vmatpush.bf16.msra.mxu0 %v119
    %135 = vmatpush.bf16.msra.mxu0 %v118
    %136 = vmatpush.bf16.msra.mxu0 %v117
    %137 = vmatpush.bf16.msra.mxu0 %v116
    %138 = vmatpush.bf16.msra.mxu0 %v115
    %139 = vmatmul.bf16.gmra.mxu0 %v62
    %v140 = vpop.f32.mrf.mxu0
    %v141 = vadd.f32 %v81, %v140
    %v142 = vpop.f32.mrf.mxu0
    %143 = vdwg.mxu0
    %vm144 = vcmask 80896
    %145 = vst.msk [vmem:[#allocation2] sm:$0xff] %vm144, %v141
    // Predicated region
    $region22: #{tpu_custom_call.1} parent=1 // pred_check
      _
    $region23: #{tpu_custom_call.1} parent=1 // pred_check_branch
      %147 = sbr.rel (0) target = $region25
    $region24: #{tpu_custom_call.1} parent=1 // pred_region
      %149 = vsyncadd [#allocation3], 0
      %s151 = sshll.u32 [#allocation2], 4
      %s152 = int_to_ptr.vmem [resolvable:$true] %s151
      %s153 = sshll.u32 %s5, 4
      %s154 = int_to_ptr.hbm [resolvable:$true] %s153
      %156 = dma.vmem_to_hbm [thread:$0]  %s152, 128, %s154, [#allocation3]
    $region25: #{tpu_custom_call.1} parent=1 // pred_fallthru
      _
    // Predicated region
    $region26: #{tpu_custom_call.1} parent=1 // pred_check
      _
    $region27: #{tpu_custom_call.1} parent=1 // pred_check_branch
      %158 = sbr.rel (0) target = $region29
    $region28: #{tpu_custom_call.1} parent=1 // pred_region
      %160 = dma.done [#allocation3], 128
    $region29: #{tpu_custom_call.1} parent=1 // pred_fallthru
      _
    %161 = vsyncpa [#allocation3], 1

</llo_original>
